<compile_context>
chip_gen: v5e
topology: v5e:2x2
jax: 0.10.0
libtpu: 0.0.40
codegen_flags: <defaults>
</compile_context>

<pallas_src>
import math

import jax
import jax.numpy as jnp
from jax.experimental import pallas as pl
from jax.experimental.pallas import tpu as pltpu

_INV_SQRT2 = 1.0 / math.sqrt(2.0)


def _round_up(x, m):
    return (x + m - 1) // m * m


def _cdiv(a, b):
    return (a + b - 1) // b


def _sublane_pack(dtype):
    # packed rows per sublane group: 8 (f32), 16 (bf16), 32 (int8/fp8)
    itemsize = jnp.dtype(dtype).itemsize
    return 8 * max(1, 4 // itemsize)


def _physical_vmem_bytes():
    try:
        return int(pltpu.get_tpu_info().vmem_capacity_bytes)
    except Exception:
        return 64 << 20  # conservative (v7x-sized) fallback


def _mlp_kernel(x_ref, w1_ref, b1_ref, w2_ref, b2_ref, o_ref, acc_ref):
    # x_ref  : (TM, Dp)   row tile of flattened (batch*seq) rows
    # w1_ref : (Dp, TH)   fc1 weight chunk (pre-transposed)
    # b1_ref : (1, TH)
    # w2_ref : (TH, Dp)   fc2 weight chunk (pre-transposed)
    # b2_ref : (1, Dp)
    # o_ref  : (TM, Dp)
    # acc_ref: (TM, Dp)   f32 accumulator over the hidden (reduction) axis
    k = pl.program_id(1)

    @pl.when(k == 0)
    def _():
        acc_ref[...] = jnp.zeros_like(acc_ref)

    # fc1 chunk on the MXU, f32 accumulation (operands share one dtype).
    h = jnp.dot(x_ref[...], w1_ref[...], preferred_element_type=jnp.float32)
    h = h + b1_ref[...].astype(jnp.float32)

    # exact (erf) GELU -- matches torch.nn.GELU() default.
    h = 0.5 * h * (1.0 + jax.lax.erf(h * _INV_SQRT2))

    # Partial fc2, accumulated in f32.  Cast h back to the weight dtype so
    # bf16 weights keep the MXU in bf16 mode (no-op when everything is f32).
    acc_ref[...] += jnp.dot(h.astype(w2_ref.dtype), w2_ref[...],
                            preferred_element_type=jnp.float32)

    @pl.when(k == pl.num_programs(1) - 1)
    def _():
        o_ref[...] = (acc_ref[...] +
                      b2_ref[...].astype(jnp.float32)).astype(o_ref.dtype)


def mlp_pallas(x, w1, b1, w2, b2, *, row_tile=None, hidden_tile=None,
               vmem_limit_bytes=None):
    """x: (..., dim); w1: (hidden, dim); b1: (hidden,);
    w2: (dim, hidden); b2: (dim,)  -- PyTorch nn.Linear layout."""
    lead_shape = x.shape[:-1]
    dim = x.shape[-1]
    hidden = w1.shape[0]
    n_rows = int(math.prod(lead_shape)) if lead_shape else 1

    # One common MXU operand dtype: avoid in-kernel up-casts on the VPU.
    if w1.dtype != x.dtype:
        w1 = w1.astype(x.dtype)
    if w2.dtype != x.dtype:
        w2 = w2.astype(x.dtype)

    x_isize = jnp.dtype(x.dtype).itemsize
    w_isize = jnp.dtype(w1.dtype).itemsize
    sublane = _sublane_pack(x.dtype)

    # ---- per-generation defaults (keyed off physical VMEM) ------------------
    phys_vmem = _physical_vmem_bytes()
    small_vmem = phys_vmem < (100 << 20)          # v7x-like: 64 MiB / core
    if vmem_limit_bytes is None:
        vmem_limit_bytes = (52 << 20) if small_vmem else (100 << 20)
    if row_tile is None:
        row_tile = 512 if small_vmem else 1024
    if hidden_tile is None:
        hidden_tile = 512 if small_vmem else 1024

    # ---- lane-dense padded sizes with balanced tiles -------------------------
    dim_p = _round_up(dim, 128)
    hid_128 = _round_up(hidden, 128)

    # hidden tile: balance chunks so padding stays small (not up to th-1).
    n_hchunks = max(1, _cdiv(hid_128, hidden_tile))
    th = min(_round_up(_cdiv(hid_128, n_hchunks), 128), hid_128)

    # row tile: balance against n_rows so padded-row compute stays < sublane.
    n_rtiles = max(1, _cdiv(n_rows, row_tile))
    tm = _round_up(_cdiv(n_rows, n_rtiles), sublane)

    # Two-TensorCore parts: keep >= 2 blocks on the parallel (row) axis.
    if small_vmem and _cdiv(n_rows, tm) < 2 and n_rows >= 2 * sublane:
        tm = _round_up(_cdiv(n_rows, 2), sublane)

    # ---- VMEM-fit check: shrink tm first, then th (never below 512) ---------
    def _vmem_estimate(tm_, th_):
        return (2 * tm_ * dim_p * x_isize        # x tile (double-buffered)
                + 2 * tm_ * dim_p * x_isize      # out tile
                + 2 * dim_p * th_ * w_isize      # w1 chunk
                + 2 * th_ * dim_p * w_isize      # w2 chunk
                + 2 * (th_ + dim_p) * 4          # bias chunks (upper bound)
                + tm_ * dim_p * 4                # f32 accumulator
                + 2 * tm_ * th_ * 4)             # f32 GELU intermediate

    budget = int(0.85 * vmem_limit_bytes)
    while _vmem_estimate(tm, th) > budget and (tm > 8 * sublane or th > 512):
        if tm > 8 * sublane and (tm >= th or th <= 512):
            tm = max(8 * sublane, _round_up(tm // 2, sublane))
        elif th > 512:
            th = max(512, _round_up(th // 2, 128))
        else:
            break

    hid_p = _round_up(hid_128, th)
    rows_p = _round_up(n_rows, tm)

    # ---- zero-pad operands (exact: padded hidden units get bias 0, GELU(0)=0,
    #      and hit zero rows of w2; padded dim columns are sliced off) --------
    x2d = jnp.pad(x.reshape(n_rows, dim),
                  ((0, rows_p - n_rows), (0, dim_p - dim)))
    w1t = jnp.pad(w1.T, ((0, dim_p - dim), (0, hid_p - hidden)))   # (Dp, Hp)
    w2t = jnp.pad(w2.T, ((0, hid_p - hidden), (0, dim_p - dim)))   # (Hp, Dp)
    b1p = jnp.pad(b1, (0, hid_p - hidden)).reshape(1, hid_p)
    b2p = jnp.pad(b2, (0, dim_p - dim)).reshape(1, dim_p)

    grid = (rows_p // tm, hid_p // th)

    b_isize = jnp.dtype(b1.dtype).itemsize
    cost = pl.CostEstimate(
        flops=4 * n_rows * dim * hidden,                 # two matmuls
        transcendentals=n_rows * hidden,                 # erf
        bytes_accessed=(x2d.size * x_isize
                        + grid[0] * (w1t.size + w2t.size) * w_isize
                        + (b1p.size + b2p.size) * b_isize
                        + rows_p * dim_p * x_isize),     # output store
    )

    out2d = pl.pallas_call(
        _mlp_kernel,
        out_shape=jax.ShapeDtypeStruct((rows_p, dim_p), x.dtype),
        grid_spec=pltpu.PrefetchScalarGridSpec(
            num_scalar_prefetch=0,
            grid=grid,
            in_specs=[
                pl.BlockSpec((tm, dim_p), lambda i, k: (i, 0)),   # x row tile
                pl.BlockSpec((dim_p, th), lambda i, k: (0, k)),   # w1^T chunk
                pl.BlockSpec((1, th), lambda i, k: (0, k)),       # b1 chunk
                pl.BlockSpec((th, dim_p), lambda i, k: (k, 0)),   # w2^T chunk
                pl.BlockSpec((1, dim_p), lambda i, k: (0, 0)),    # b2
            ],
            out_specs=pl.BlockSpec((tm, dim_p), lambda i, k: (i, 0)),
            scratch_shapes=[pltpu.VMEM((tm, dim_p), jnp.float32)],
        ),
        compiler_params=pltpu.CompilerParams(
            dimension_semantics=("parallel", "arbitrary"),
            vmem_limit_bytes=int(vmem_limit_bytes),
        ),
        cost_estimate=cost,
    )(x2d, w1t, b1p, w2t, b2p)

    return out2d[:n_rows, :dim].reshape(*lead_shape, dim)


def _torch_linear_init(key, out_features, in_features, dtype=jnp.float32):
    """Deterministic init matching torch.nn.Linear defaults."""
    kw, kb = jax.random.split(key)
    bound = 1.0 / math.sqrt(in_features)
    w = jax.random.uniform(kw, (out_features, in_features), dtype,
                           minval=-bound, maxval=bound)
    b = jax.random.uniform(kb, (out_features,), dtype,
                           minval=-bound, maxval=bound)
    return w, b


def _reference_mlp(x, w1, b1, w2, b2):
    h = jnp.einsum("bsd,hd->bsh", x, w1) + b1
    h = 0.5 * h * (1.0 + jax.lax.erf(h * _INV_SQRT2))
    return jnp.einsum("bsh,dh->bsd", h, w2) + b2


if __name__ == "__main__":
    batch, seq, dim, hidden = 2, 8, 32, 64

    key = jax.random.PRNGKey(0)
    kx, k1, k2 = jax.random.split(key, 3)

    x = jax.random.normal(kx, (batch, seq, dim), jnp.float32)
    w1, b1 = _torch_linear_init(k1, hidden, dim)   # fc1: (hidden, dim)
    w2, b2 = _torch_linear_init(k2, dim, hidden)   # fc2: (dim, hidden)

    out = mlp_pallas(x, w1, b1, w2, b2)
    out = jax.block_until_ready(out)

    ref = _reference_mlp(x, w1, b1, w2, b2)
    assert out.shape == (batch, seq, dim)
    assert jnp.allclose(out, ref, atol=1e-5, rtol=1e-5), "mismatch vs reference"

    print("KERNEL_OK")
</pallas_src>

<mosaic_0001>
module attributes {stable_mosaic.version = 11 : i64} {
  func.func @_mlp_kernel(%arg0: i32, %arg1: i32, %arg2: memref<8x128xf32, #tpu.memory_space<vmem>>, %arg3: memref<128x128xf32, #tpu.memory_space<vmem>>, %arg4: memref<1x128xf32, #tpu.memory_space<vmem>>, %arg5: memref<128x128xf32, #tpu.memory_space<vmem>>, %arg6: memref<1x128xf32, #tpu.memory_space<vmem>>, %arg7: memref<8x128xf32, #tpu.memory_space<vmem>>, %arg8: memref<8x128xf32, #tpu.memory_space<vmem>>) attributes {dimension_semantics = [#tpu.dimension_semantics<parallel>, #tpu.dimension_semantics<arbitrary>], iteration_bounds = array<i64: 2, 1>, scalar_prefetch = 0 : i64, scratch_operands = 1 : i64, tpu.core_type = #tpu.core_type<tc>, window_params = [{transform_indices = @transform_0, window_bounds = array<i64: 8, 128>}, {transform_indices = @transform_1, window_bounds = array<i64: 128, 128>}, {transform_indices = @transform_2, window_bounds = array<i64: 1, 128>}, {transform_indices = @transform_3, window_bounds = array<i64: 128, 128>}, {pipeline_mode = #tpu.pipeline_mode<synchronous>, transform_indices = @transform_4, window_bounds = array<i64: 1, 128>}, {transform_indices = @transform_5, window_bounds = array<i64: 8, 128>}]} {
    %c0_i32 = arith.constant 0 : i32
    %0 = arith.cmpi eq, %arg1, %c0_i32 : i32
    %1 = arith.extui %0 : i1 to i32
    %c0_i32_0 = arith.constant 0 : i32
    %2 = arith.cmpi ne, %1, %c0_i32_0 : i32
    scf.if %2 {
      %cst_18 = arith.constant 0.000000e+00 : f32
      %25 = vector.broadcast %cst_18 : f32 to vector<8x128xf32>
      %c0_19 = arith.constant 0 : index
      %c0_20 = arith.constant 0 : index
      %26 = vector.load %arg8[%c0_19, %c0_20] : memref<8x128xf32, #tpu.memory_space<vmem>>, vector<8x128xf32>
      tpu.vector_store %arg8[%c0_19, %c0_20], %25 {strides = array<i32>} : memref<8x128xf32, #tpu.memory_space<vmem>>, vector<8x128xf32>,
    } else {
    }
    %c0 = arith.constant 0 : index
    %c0_1 = arith.constant 0 : index
    %3 = vector.load %arg2[%c0, %c0_1] : memref<8x128xf32, #tpu.memory_space<vmem>>, vector<8x128xf32>
    %c0_2 = arith.constant 0 : index
    %c0_3 = arith.constant 0 : index
    %4 = vector.load %arg3[%c0_2, %c0_3] : memref<128x128xf32, #tpu.memory_space<vmem>>, vector<128x128xf32>
    %cst = arith.constant dense<0.000000e+00> : vector<8x128xf32>
    %5 = tpu.matmul %3, %4, %cst {dimension_numbers = #tpu.dot_dimension_numbers<[1], [0], [0], [1], [0, 0, 1, 1], [], []>} : vector<8x128xf32>, vector<128x128xf32>, vector<8x128xf32> -> vector<8x128xf32>
    %c0_4 = arith.constant 0 : index
    %c0_5 = arith.constant 0 : index
    %6 = vector.load %arg4[%c0_4, %c0_5] : memref<1x128xf32, #tpu.memory_space<vmem>>, vector<1x128xf32>
    %7 = vector.broadcast %6 : vector<1x128xf32> to vector<8x128xf32>
    %8 = arith.addf %5, %7 : vector<8x128xf32>
    %cst_6 = arith.constant 5.000000e-01 : f32
    %9 = vector.broadcast %cst_6 : f32 to vector<8x128xf32>
    %10 = arith.mulf %9, %8 : vector<8x128xf32>
    %cst_7 = arith.constant 0.707106769 : f32
    %11 = vector.broadcast %cst_7 : f32 to vector<8x128xf32>
    %12 = arith.mulf %8, %11 : vector<8x128xf32>
    %13 = math.erf %12 : vector<8x128xf32>
    %cst_8 = arith.constant 1.000000e+00 : f32
    %14 = vector.broadcast %cst_8 : f32 to vector<8x128xf32>
    %15 = arith.addf %14, %13 : vector<8x128xf32>
    %16 = arith.mulf %10, %15 : vector<8x128xf32>
    %c0_9 = arith.constant 0 : index
    %c0_10 = arith.constant 0 : index
    %17 = vector.load %arg8[%c0_9, %c0_10] : memref<8x128xf32, #tpu.memory_space<vmem>>, vector<8x128xf32>
    %c0_11 = arith.constant 0 : index
    %c0_12 = arith.constant 0 : index
    %18 = vector.load %arg5[%c0_11, %c0_12] : memref<128x128xf32, #tpu.memory_space<vmem>>, vector<128x128xf32>
    %cst_13 = arith.constant dense<0.000000e+00> : vector<8x128xf32>
    %19 = tpu.matmul %16, %18, %cst_13 {dimension_numbers = #tpu.dot_dimension_numbers<[1], [0], [0], [1], [0, 0, 1, 1], [], []>} : vector<8x128xf32>, vector<128x128xf32>, vector<8x128xf32> -> vector<8x128xf32>
    %20 = arith.addf %17, %19 : vector<8x128xf32>
    %c0_14 = arith.constant 0 : index
    %c0_15 = arith.constant 0 : index
    %21 = vector.load %arg8[%c0_14, %c0_15] : memref<8x128xf32, #tpu.memory_space<vmem>>, vector<8x128xf32>
    tpu.vector_store %arg8[%c0_14, %c0_15], %20 {strides = array<i32>} : memref<8x128xf32, #tpu.memory_space<vmem>>, vector<8x128xf32>,
    %c0_i32_16 = arith.constant 0 : i32
    %22 = arith.cmpi eq, %arg1, %c0_i32_16 : i32
    %23 = arith.extui %22 : i1 to i32
    %c0_i32_17 = arith.constant 0 : i32
    %24 = arith.cmpi ne, %23, %c0_i32_17 : i32
    scf.if %24 {
      %c0_18 = arith.constant 0 : index
      %c0_19 = arith.constant 0 : index
      %25 = vector.load %arg8[%c0_18, %c0_19] : memref<8x128xf32, #tpu.memory_space<vmem>>, vector<8x128xf32>
      %c0_20 = arith.constant 0 : index
      %c0_21 = arith.constant 0 : index
      %26 = vector.load %arg6[%c0_20, %c0_21] : memref<1x128xf32, #tpu.memory_space<vmem>>, vector<1x128xf32>
      %27 = vector.broadcast %26 : vector<1x128xf32> to vector<8x128xf32>
      %28 = arith.addf %25, %27 : vector<8x128xf32>
      %c0_22 = arith.constant 0 : index
      %c0_23 = arith.constant 0 : index
      %29 = vector.load %arg7[%c0_22, %c0_23] : memref<8x128xf32, #tpu.memory_space<vmem>>, vector<8x128xf32>
      tpu.vector_store %arg7[%c0_22, %c0_23], %28 {strides = array<i32>} : memref<8x128xf32, #tpu.memory_space<vmem>>, vector<8x128xf32>,
    } else {
    }
    return
  }
  func.func @transform_0(%arg0: i32, %arg1: i32) -> (i32, i32) {
    %c0_i32 = arith.constant 0 : i32
    %c0_i32_0 = arith.constant 0 : i32
    return %arg0, %c0_i32 : i32, i32
  }
  func.func @transform_1(%arg0: i32, %arg1: i32) -> (i32, i32) {
    %c0_i32 = arith.constant 0 : i32
    %c0_i32_0 = arith.constant 0 : i32
    return %c0_i32, %arg1 : i32, i32
  }
  func.func @transform_2(%arg0: i32, %arg1: i32) -> (i32, i32) {
    %c0_i32 = arith.constant 0 : i32
    %c0_i32_0 = arith.constant 0 : i32
    return %c0_i32, %arg1 : i32, i32
  }
  func.func @transform_3(%arg0: i32, %arg1: i32) -> (i32, i32) {
    %c0_i32 = arith.constant 0 : i32
    %c0_i32_0 = arith.constant 0 : i32
    return %arg1, %c0_i32 : i32, i32
  }
  func.func @transform_4(%arg0: i32, %arg1: i32) -> (i32, i32) {
    %c0_i32 = arith.constant 0 : i32
    %c0_i32_0 = arith.constant 0 : i32
    %c0_i32_1 = arith.constant 0 : i32
    return %c0_i32, %c0_i32_0 : i32, i32
  }
  func.func @transform_5(%arg0: i32, %arg1: i32) -> (i32, i32) {
    %c0_i32 = arith.constant 0 : i32
    %c0_i32_0 = arith.constant 0 : i32
    return %arg0, %c0_i32 : i32, i32
  }
}

</mosaic_0001>

<llo_original>
// kernel: tpu_custom_call.1
$region0: #{tpu_custom_call.1}
  #allocation0 [shape = 'u32[]', space=smem, size = 0x4, offset = 0x4, fixed_abs, tag = 'smem constant byte address 0x4 - core index']
  #allocation1 [shape = 'u32[72,128]{1,0:T(1,128)}', space=vmem, size = 0x9000, scoped, tag = 'internal scratch']
  #allocation2 [shape = 'f32[8,128]{1,0:T(8,128)}', space=vmem, size = 0x1000, scoped, tag = 'scratch operand']
  %s0 = inlined_call_operand.hbm [shape: f32[16,128], index: 0, kind: input, shape index: {}]
  %s1 = inlined_call_operand.hbm [shape: f32[128,128], index: 1, kind: input, shape index: {}]
  %s2 = inlined_call_operand.vmem [shape: f32[1,128], index: 2, kind: input, shape index: {}]
  %s3 = inlined_call_operand.hbm [shape: f32[128,128], index: 3, kind: input, shape index: {}]
  %s4 = inlined_call_operand.vmem [shape: f32[1,128], index: 4, kind: input, shape index: {}]
  %s5 = inlined_call_operand.hbm [shape: f32[16,128], index: 5, kind: output, shape index: {}]
  %s6 = sld [smem:[#allocation0]]
  $region73: #{tpu_custom_call.1} parent=0
    _
  %s8 = ssub.s32 1, %s6
  %s9 = scalar_select 0, %s8, %s6
  $region1: #{tpu_custom_call.1} parent=0
    #allocation3 [shape = 'u8[8192]{0}', space=vmem, size = 0x2000, scoped, tag = 'input window, operand 0']
    #allocation4 [shape = 's32[2]{0}', space=sflag, size = 0x8, scoped, tag = 'scoped memory for tpu_custom_call.1']
    #allocation5 [shape = 's32[2]{0}', space=sflag, size = 0x8, scoped, tag = 'scoped memory for tpu_custom_call.1']
    #allocation6 [shape = 'u8[65536]{0}', space=vmem, size = 0x10000, scoped, tag = 'input window, operand 1, single buffered']
    #allocation7 [shape = 's32[1]{0}', space=sflag, size = 0x4, scoped, tag = 'scoped memory for tpu_custom_call.1']
    #allocation8 [shape = 'u8[65536]{0}', space=vmem, size = 0x10000, scoped, tag = 'input window, operand 3, single buffered']
    #allocation9 [shape = 'u8[8192]{0}', space=vmem, size = 0x2000, scoped, tag = 'output window, operand 0']
    %10 = vsyncpa [#allocation4], 0
    %s11 = scalar_lea.sflag [#allocation4], 1
    %12 = vsyncpa %s11, 0
    %13 = vsyncpa [#allocation7], 0
    %14 = vsyncpa [#allocation5], 0
    %s15 = scalar_lea.sflag [#allocation5], 1
    %16 = vsyncpa %s15, 0
    loop: start=0, step=1, limit=4
    $region2: #{tpu_custom_call.1} parent=1 // loop_pre_header
      _
    $region3: #{tpu_custom_call.1} parent=1 // loop_header
      %s18 = sphi 0, %s22
      %p19 = scmp.ge.s32.totalorder %s18, 4
      %s25 = sphi 0, %s37
      %s26 = sphi 0, %s33
      %s27 = sphi 0, %s25
      %s28 = sphi 0, %s26
      %s29 = sphi 0, %s27
      %s30 = sphi 0, %s28
      %s40 = sphi 0, %s42
      %s43 = sphi 0, %s40
      %s44 = sphi 0, %s43
      %s60 = sphi 0, %s44
      %s66 = sphi 0, %s68
      %s69 = sphi 0, %s66
      %s70 = sphi 0, %s69
      %s86 = sphi 0, %s70
      %s92 = sphi 0, %s94
      %s95 = sphi 0, %s92
      %s96 = sphi 0, %s95
      %s112 = sphi 0, %s96
      %s118 = sphi 0, %s120
      %s121 = sphi 0, %s118
      %s122 = sphi 0, %s121
      %s138 = sphi 0, %s122
      %s142 = sphi 0, %s142
      %s144 = sphi 0, %s142
      %s145 = sphi 0, %s144
      %s159 = sphi 0, %s145
      %s165 = sphi 0, %s167
      %s168 = sphi 0, %s165
      %s169 = sphi 0, %s168
      %s185 = sphi 0, %s169
    $region4: #{tpu_custom_call.1} parent=1 // loop_header_branch
      %21 = sbr.rel (%p19) target = $region8
    $region5: #{tpu_custom_call.1} parent=1 // loop_body
      %s23 = ssub.s32 %s18, 1
      %s24 = ssub.s32 %s18, 2
      %s31 = sadd.s32 1, %s26
      %p32 = scmp.ge.s32.totalorder %s31, 1
      %s33 = scalar_select %p32, 0, %s31
      %s34 = sadd.s32 1, %s25
      %s35 = scalar_select %p32, %s34, %s25
      %p36 = scmp.ge.s32.totalorder %s35, 2
      %s37 = scalar_select %p36, 0, %s35
      %s38 = ssub.s32 %s25, %s37
      %p39 = scmp.eq.s32.totalorder %s38, 0
      %s41 = sadd.s32 %s40, 1
      %s42 = scalar_select %p39, %s40, %s41
      %p45 = pneg %p39
      %p46 = scmp.eq.s32.totalorder %s18, 1
      %p47 = por %p45, %p46
      %p48 = scmp.ne.s32.totalorder %s40, %s43
      %p49 = scmp.eq.s32.totalorder %s18, 0
      %p50 = por %p48, %p49
      %p51 = scmp.ne.s32.totalorder %s40, %s43
      %p52 = scmp.eq.s32.totalorder %s23, 1
      %p53 = por %p51, %p52
      %p54 = scmp.ne.s32.totalorder %s43, %s44
      %p55 = scmp.eq.s32.totalorder %s23, 0
      %p56 = por %p54, %p55
      %p57 = scmp.ne.s32.totalorder %s43, %s44
      %p58 = scmp.eq.s32.totalorder %s24, 1
      %p59 = por %p57, %p58
      %p61 = scmp.ne.s32.totalorder %s44, %s60
      %p62 = scmp.eq.s32.totalorder %s24, 0
      %p63 = por %p61, %p62
      %s64 = ssub.s32 %s26, %s33
      %p65 = scmp.eq.s32.totalorder %s64, 0
      %s67 = sadd.s32 %s66, 1
      %s68 = scalar_select %p65, %s66, %s67
      %p71 = pneg %p65
      %p72 = scmp.eq.s32.totalorder %s18, 1
      %p73 = por %p71, %p72
      %p74 = scmp.ne.s32.totalorder %s66, %s69
      %p75 = scmp.eq.s32.totalorder %s18, 0
      %p76 = por %p74, %p75
      %p77 = scmp.ne.s32.totalorder %s66, %s69
      %p78 = scmp.eq.s32.totalorder %s23, 1
      %p79 = por %p77, %p78
      %p80 = scmp.ne.s32.totalorder %s69, %s70
      %p81 = scmp.eq.s32.totalorder %s23, 0
      %p82 = por %p80, %p81
      %p83 = scmp.ne.s32.totalorder %s69, %s70
      %p84 = scmp.eq.s32.totalorder %s24, 1
      %p85 = por %p83, %p84
      %p87 = scmp.ne.s32.totalorder %s70, %s86
      %p88 = scmp.eq.s32.totalorder %s24, 0
      %p89 = por %p87, %p88
      %s90 = ssub.s32 %s26, %s33
      %p91 = scmp.eq.s32.totalorder %s90, 0
      %s93 = sadd.s32 %s92, 1
      %s94 = scalar_select %p91, %s92, %s93
      %p97 = pneg %p91
      %p98 = scmp.eq.s32.totalorder %s18, 1
      %p99 = por %p97, %p98
      %p100 = scmp.ne.s32.totalorder %s92, %s95
      %p101 = scmp.eq.s32.totalorder %s18, 0
      %p102 = por %p100, %p101
      %p103 = scmp.ne.s32.totalorder %s92, %s95
      %p104 = scmp.eq.s32.totalorder %s23, 1
      %p105 = por %p103, %p104
      %p106 = scmp.ne.s32.totalorder %s95, %s96
      %p107 = scmp.eq.s32.totalorder %s23, 0
      %p108 = por %p106, %p107
      %p109 = scmp.ne.s32.totalorder %s95, %s96
      %p110 = scmp.eq.s32.totalorder %s24, 1
      %p111 = por %p109, %p110
      %p113 = scmp.ne.s32.totalorder %s96, %s112
      %p114 = scmp.eq.s32.totalorder %s24, 0
      %p115 = por %p113, %p114
      %s116 = ssub.s32 %s26, %s33
      %p117 = scmp.eq.s32.totalorder %s116, 0
      %s119 = sadd.s32 %s118, 1
      %s120 = scalar_select %p117, %s118, %s119
      %p123 = pneg %p117
      %p124 = scmp.eq.s32.totalorder %s18, 1
      %p125 = por %p123, %p124
      %p126 = scmp.ne.s32.totalorder %s118, %s121
      %p127 = scmp.eq.s32.totalorder %s18, 0
      %p128 = por %p126, %p127
      %p129 = scmp.ne.s32.totalorder %s118, %s121
      %p130 = scmp.eq.s32.totalorder %s23, 1
      %p131 = por %p129, %p130
      %p132 = scmp.ne.s32.totalorder %s121, %s122
      %p133 = scmp.eq.s32.totalorder %s23, 0
      %p134 = por %p132, %p133
      %p135 = scmp.ne.s32.totalorder %s121, %s122
      %p136 = scmp.eq.s32.totalorder %s24, 1
      %p137 = por %p135, %p136
      %p139 = scmp.ne.s32.totalorder %s122, %s138
      %p140 = scmp.eq.s32.totalorder %s24, 0
      %p141 = por %p139, %p140
      %s143 = sadd.s32 %s142, 1
      %p146 = scmp.eq.s32.totalorder %s18, 1
      %p147 = scmp.ne.s32.totalorder %s142, %s144
      %p148 = scmp.eq.s32.totalorder %s18, 0
      %p149 = por %p147, %p148
      %p150 = scmp.ne.s32.totalorder %s142, %s144
      %p151 = scmp.eq.s32.totalorder %s23, 1
      %p152 = por %p150, %p151
      %p153 = scmp.ne.s32.totalorder %s144, %s145
      %p154 = scmp.eq.s32.totalorder %s23, 0
      %p155 = por %p153, %p154
      %p156 = scmp.ne.s32.totalorder %s144, %s145
      %p157 = scmp.eq.s32.totalorder %s24, 1
      %p158 = por %p156, %p157
      %p160 = scmp.ne.s32.totalorder %s145, %s159
      %p161 = scmp.eq.s32.totalorder %s24, 0
      %p162 = por %p160, %p161
      %s163 = ssub.s32 %s25, %s37
      %p164 = scmp.eq.s32.totalorder %s163, 0
      %s166 = sadd.s32 %s165, 1
      %s167 = scalar_select %p164, %s165, %s166
      %p170 = pneg %p164
      %p171 = scmp.eq.s32.totalorder %s18, 1
      %p172 = por %p170, %p171
      %p173 = scmp.ne.s32.totalorder %s165, %s168
      %p174 = scmp.eq.s32.totalorder %s18, 0
      %p175 = por %p173, %p174
      %p176 = scmp.ne.s32.totalorder %s165, %s168
      %p177 = scmp.eq.s32.totalorder %s23, 1
      %p178 = por %p176, %p177
      %p179 = scmp.ne.s32.totalorder %s168, %s169
      %p180 = scmp.eq.s32.totalorder %s23, 0
      %p181 = por %p179, %p180
      %p182 = scmp.ne.s32.totalorder %s168, %s169
      %p183 = scmp.eq.s32.totalorder %s24, 1
      %p184 = por %p182, %p183
      %p186 = scmp.ne.s32.totalorder %s169, %s185
      %p187 = scmp.eq.s32.totalorder %s24, 0
      %p188 = por %p186, %p187
      %p189 = scmp.le.s32.totalorder 1, %s18
      %p190 = scmp.lt.s32.totalorder %s18, 3
      %p191 = pnand %p189, %p190
      %p192 = pneg %p191
      // Predicated region
      $region9: #{tpu_custom_call.1} parent=5 // pred_check
        _
      $region10: #{tpu_custom_call.1} parent=5 // pred_check_branch
        %194 = sbr.rel (%p191) target = $region12
      $region11: #{tpu_custom_call.1} parent=5 // pred_region
        %s195 = ssub.s32 %s18, 1
        // Predicated region
        $region13: #{tpu_custom_call.1} parent=11 // pred_check
          %p196 = pneg %p82
        $region14: #{tpu_custom_call.1} parent=11 // pred_check_branch
          %198 = sbr.rel (%p196) target = $region16
        $region15: #{tpu_custom_call.1} parent=11 // pred_region
          %200 = vsyncadd [#allocation7], 0
          %s201 = smul.addr %s28, 8
          %s202 = scalar_lea.hbm %s1, %s201
          %s203 = sshll.u32 %s202, 4
          %s204 = int_to_ptr.hbm [resolvable:$true] %s203
          %s205 = sshll.u32 [#allocation6], 4
          %s206 = int_to_ptr.vmem [resolvable:$true] %s205
          %211 = dma.hbm_to_vmem [thread:$0]  %s204, 2048, %s206, [#allocation7], 128, 128, 8
        $region16: #{tpu_custom_call.1} parent=11 // pred_fallthru
          _
        // Predicated region
        $region17: #{tpu_custom_call.1} parent=11 // pred_check
          %p212 = pneg %p108
        $region18: #{tpu_custom_call.1} parent=11 // pred_check_branch
          %214 = sbr.rel (%p212) target = $region20
        $region19: #{tpu_custom_call.1} parent=11 // pred_region
          %p215 = scmp.lt.s32.totalorder %s28, 0
          %s216 = scalar_select %p215, %s28, 0
          %s217 = scalar_lea.vmem %s2, %s216
        $region20: #{tpu_custom_call.1} parent=11 // pred_fallthru
          _
        // Predicated region
        $region21: #{tpu_custom_call.1} parent=11 // pred_check
          %p218 = pneg %p134
        $region22: #{tpu_custom_call.1} parent=11 // pred_check_branch
          %220 = sbr.rel (%p218) target = $region24
        $region23: #{tpu_custom_call.1} parent=11 // pred_region
          %s221 = smul.u32 16, %s28
          %223 = vsyncadd [#allocation7], 0
          %s224 = smul.addr %s221, 8
          %s225 = scalar_lea.hbm %s3, %s224
          %s226 = sshll.u32 %s225, 4
          %s227 = int_to_ptr.hbm [resolvable:$true] %s226
          %s228 = sshll.u32 [#allocation8], 4
          %s229 = int_to_ptr.vmem [resolvable:$true] %s228
          %234 = dma.hbm_to_vmem [thread:$0]  %s227, 2048, %s229, [#allocation7], 128, 128, 8
        $region24: #{tpu_custom_call.1} parent=11 // pred_fallthru
          _
        // Predicated region
        $region25: #{tpu_custom_call.1} parent=11 // pred_check
          %p235 = pneg %p155
        $region26: #{tpu_custom_call.1} parent=11 // pred_check_branch
          %237 = sbr.rel (%p235) target = $region28
        $region27: #{tpu_custom_call.1} parent=11 // pred_region
          _
        $region28: #{tpu_custom_call.1} parent=11 // pred_fallthru
          _
      $region12: #{tpu_custom_call.1} parent=5 // pred_fallthru
        _
      %p238 = scmp.lt.s32.totalorder %s18, 2
      // Predicated region
      $region29: #{tpu_custom_call.1} parent=5 // pred_check
        %p239 = pneg %p238
      $region30: #{tpu_custom_call.1} parent=5 // pred_check_branch
        %241 = sbr.rel (%p239) target = $region32
      $region31: #{tpu_custom_call.1} parent=5 // pred_region
        // Predicated region
        $region33: #{tpu_custom_call.1} parent=31 // pred_check
          %p242 = pneg %p50
        $region34: #{tpu_custom_call.1} parent=31 // pred_check_branch
          %244 = sbr.rel (%p242) target = $region36
        $region35: #{tpu_custom_call.1} parent=31 // pred_region
          %s245 = sand.u32 %s40, 1
          %s246 = scalar_lea.sflag [#allocation4], %s245
          %s247 = sand.u32 %s40, 1
          %s248 = smul.addr %s247, 8
          %s249 = scalar_lea.vmem [#allocation3], %s248
          %251 = vsyncadd %s246, 0
          %s252 = smul.addr %s25, 8
          %s253 = scalar_lea.hbm %s0, %s252
          %s255 = sshll.u32 %s253, 4
          %s256 = int_to_ptr.hbm [resolvable:$true] %s255
          %s257 = sshll.u32 %s249, 4
          %s258 = int_to_ptr.vmem [resolvable:$true] %s257
          %260 = dma.hbm_to_vmem [thread:$0]  %s256, 128, %s258, %s246
        $region36: #{tpu_custom_call.1} parent=31 // pred_fallthru
          _
      $region32: #{tpu_custom_call.1} parent=5 // pred_fallthru
        _
      %p261 = scmp.le.s32.totalorder 1, %s18
      %p262 = scmp.lt.s32.totalorder %s18, 3
      %p263 = pnand %p261, %p262
      %p264 = pneg %p263
      // Predicated region
      $region37: #{tpu_custom_call.1} parent=5 // pred_check
        _
      $region38: #{tpu_custom_call.1} parent=5 // pred_check_branch
        %266 = sbr.rel (%p263) target = $region40
      $region39: #{tpu_custom_call.1} parent=5 // pred_region
        %s267 = ssub.s32 %s18, 1
        %s268 = sand.u32 %s43, 1
        %s269 = scalar_lea.sflag [#allocation4], %s268
        %s270 = sand.u32 %s43, 1
        %s271 = smul.addr %s270, 8
        %s272 = scalar_lea.vmem [#allocation3], %s271
        // Predicated region
        $region41: #{tpu_custom_call.1} parent=39 // pred_check
          %p273 = pneg %p56
        $region42: #{tpu_custom_call.1} parent=39 // pred_check_branch
          %275 = sbr.rel (%p273) target = $region44
        $region43: #{tpu_custom_call.1} parent=39 // pred_region
          %277 = dma.done %s269, 128
        $region44: #{tpu_custom_call.1} parent=39 // pred_fallthru
          _
        // Predicated region
        $region45: #{tpu_custom_call.1} parent=39 // pred_check
          %p278 = pneg %p82
        $region46: #{tpu_custom_call.1} parent=39 // pred_check_branch
          %280 = sbr.rel (%p278) target = $region48
        $region47: #{tpu_custom_call.1} parent=39 // pred_region
          %282 = dma.done [#allocation7], 2048
        $region48: #{tpu_custom_call.1} parent=39 // pred_fallthru
          _
        // Predicated region
        $region49: #{tpu_custom_call.1} parent=39 // pred_check
          %p283 = pneg %p134
        $region50: #{tpu_custom_call.1} parent=39 // pred_check_branch
          %285 = sbr.rel (%p283) target = $region52
        $region51: #{tpu_custom_call.1} parent=39 // pred_region
          %287 = dma.done [#allocation7], 2048
        $region52: #{tpu_custom_call.1} parent=39 // pred_fallthru
          _
        %s288 = sand.u32 %s43, 1
        %s289 = scalar_lea.sflag [#allocation4], %s288
        %s290 = sand.u32 %s43, 1
        %s291 = smul.addr %s290, 8
        %s292 = scalar_lea.vmem [#allocation3], %s291
        %p293 = pneg %p56
        %p294 = pneg %p53
        %p295 = pneg %p82
        %p296 = pneg %p79
        %p297 = scmp.lt.s32.totalorder %s28, 0
        %s298 = scalar_select %p297, %s28, 0
        %s299 = scalar_lea.vmem %s2, %s298
        %p300 = pneg %p108
        %p301 = pneg %p105
        %p302 = pneg %p134
        %p303 = pneg %p131
        %p304 = pneg %p155
        %p305 = pneg %p152
        %p306 = pneg %p181
        %p307 = pneg %p178
        %s308 = sand.u32 %s168, 1
        %s309 = scalar_lea.sflag [#allocation5], %s308
        %s310 = sand.u32 %s168, 1
        %s311 = smul.addr %s310, 8
        %s312 = scalar_lea.vmem [#allocation9], %s311
        %p313 = scmp.lt.s32.totalorder %s28, 0
        %s314 = scalar_select %p313, %s28, 0
        %s315 = scalar_lea.vmem %s2, %s314
        %s316 = smul.u32 16, %s28
        %p317 = scmp.eq.s32.totalorder %s28, 0
        // Predicated region
        $region53: #{tpu_custom_call.1} parent=39 // pred_check
          %p318 = pneg %p317
        $region54: #{tpu_custom_call.1} parent=39 // pred_check_branch
          %320 = sbr.rel (%p318) target = $region56
        $region55: #{tpu_custom_call.1} parent=39 // pred_region
          %321 = vst [vmem:[#allocation2] sm:$0xff] 0.0
        $region56: #{tpu_custom_call.1} parent=39 // pred_fallthru
          _
        %v322 = vld [vmem:[%s272] sm:$0xff]
        %v323 = vld [vmem:[#allocation6] sm:$0xff]
        %v324 = vld [vmem:[#allocation6 + $0x8] sm:$0xff]
        %v325 = vld [vmem:[#allocation6 + $0x10] sm:$0xff]
        %v326 = vld [vmem:[#allocation6 + $0x18] sm:$0xff]
        %v327 = vld [vmem:[#allocation6 + $0x20] sm:$0xff]
        %v328 = vld [vmem:[#allocation6 + $0x28] sm:$0xff]
        %v329 = vld [vmem:[#allocation6 + $0x30] sm:$0xff]
        %v330 = vld [vmem:[#allocation6 + $0x38] sm:$0xff]
        %v331 = vld [vmem:[#allocation6 + $0x40] sm:$0xff]
        %v332 = vld [vmem:[#allocation6 + $0x48] sm:$0xff]
        %v333 = vld [vmem:[#allocation6 + $0x50] sm:$0xff]
        %v334 = vld [vmem:[#allocation6 + $0x58] sm:$0xff]
        %v335 = vld [vmem:[#allocation6 + $0x60] sm:$0xff]
        %v336 = vld [vmem:[#allocation6 + $0x68] sm:$0xff]
        %v337 = vld [vmem:[#allocation6 + $0x70] sm:$0xff]
        %v338 = vld [vmem:[#allocation6 + $0x78] sm:$0xff]
        %v339 = vld [vmem:[%s315] sm:$0x1]
        %v341 = vperm.slane %v339, 0
        %343 = vmatpush.msra.mxu0 %v338
        %344 = vmatpush.msra.mxu0 %v337
        %345 = vmatpush.msra.mxu0 %v336
        %346 = vmatpush.msra.mxu0 %v335
        %347 = vmatpush.msra.mxu0 %v334
        %348 = vmatpush.msra.mxu0 %v333
        %349 = vmatpush.msra.mxu0 %v332
        %350 = vmatpush.msra.mxu0 %v331
        %351 = vmatpush.msra.mxu0 %v330
        %352 = vmatpush.msra.mxu0 %v329
        %353 = vmatpush.msra.mxu0 %v328
        %354 = vmatpush.msra.mxu0 %v327
        %355 = vmatpush.msra.mxu0 %v326
        %356 = vmatpush.msra.mxu0 %v325
        %357 = vmatpush.msra.mxu0 %v324
        %358 = vmatpush.msra.mxu0 %v323
        %359 = vmatmul.f32.gmra.mxu0 %v322
        %v360 = vpop.f32.mrf.mxu0
        %v361 = vadd.f32 %v341, %v360
        %362 = vdwg.mxu0
        %v363 = vmul.f32 %v361, 0.5
        %v364 = vmul.f32 %v361, 0.70710677
        %v365 = vmul.f32 %v364, %v364
        %v366 = vmin.f32 16.0, %v365
        %v367 = vmul.f32 %v366, 2.1237322e-06
        %v368 = vadd.f32 %v367, 0.00028619796
        %v369 = vmul.f32 %v366, %v368
        %v370 = vadd.f32 %v369, 0.0036580483
        %v371 = vmul.f32 %v366, %v370
        %v372 = vadd.f32 %v371, 0.05243302
        %v373 = vmul.f32 %v366, %v372
        %v374 = vadd.f32 %v373, 0.18741608
        %v375 = vmul.f32 %v366, %v374
        %v376 = vadd.f32 %v375, 1.1283791
        %v377 = vmul.f32 %v364, %v376
        %v378 = vmul.f32 %v366, 3.8918573e-05
        %v379 = vadd.f32 %v378, 0.001143296
        %v380 = vmul.f32 %v366, %v379
        %v381 = vadd.f32 %v380, 0.014752088
        %v382 = vmul.f32 %v366, %v381
        %v383 = vadd.f32 %v382, 0.112945676
        %v384 = vmul.f32 %v366, %v383
        %v385 = vadd.f32 %v384, 0.4994258
        %v386 = vmul.f32 %v366, %v385
        %v387 = vadd.f32 %v386, 1.0
        %v388 = vrcp.pop %v387
        %v389 = vmul.f32 %v387, %v388
        %v390 = vsub.f32 1.0, %v389
        %v391 = vmul.f32 %v388, %v390
        %v392 = vadd.f32 %v388, %v391
        %vm393 = vweird.f32 %v387
        %vm394 = vweird.f32 %v388
        %vm395 = vmor %vm393, %vm394
        %v396 = vsel %vm395, %v388, %v392
        %v397 = vand.u32 2147483647, %v387
        %vm398 = vcmp.eq.f32.partialorder %v397, 8.507059e+37
        %v399 = vand.u32 %v387, 2147483648
        %v400 = vor.u32 1.1754944e-38, %v399
        %v401 = vsel %vm398, %v400, %v396
        %v402 = vmul.f32 %v377, %v401
        %v403 = vmin.f32 %v402, 1.0
        %v404 = vmax.f32 %v403, -1.0
        %v405 = vadd.f32 %v404, 1.0
        %v406 = vmul.f32 %v363, %v405
        %v407 = vld [vmem:[#allocation2] sm:$0xff]
        %v408 = vld [vmem:[#allocation8] sm:$0xff]
        %v409 = vld [vmem:[#allocation8 + $0x8] sm:$0xff]
        %v410 = vld [vmem:[#allocation8 + $0x10] sm:$0xff]
        %v411 = vld [vmem:[#allocation8 + $0x18] sm:$0xff]
        %v412 = vld [vmem:[#allocation8 + $0x20] sm:$0xff]
        %v413 = vld [vmem:[#allocation8 + $0x28] sm:$0xff]
        %v414 = vld [vmem:[#allocation8 + $0x30] sm:$0xff]
        %v415 = vld [vmem:[#allocation8 + $0x38] sm:$0xff]
        %v416 = vld [vmem:[#allocation8 + $0x40] sm:$0xff]
        %v417 = vld [vmem:[#allocation8 + $0x48] sm:$0xff]
        %v418 = vld [vmem:[#allocation8 + $0x50] sm:$0xff]
        %v419 = vld [vmem:[#allocation8 + $0x58] sm:$0xff]
        %v420 = vld [vmem:[#allocation8 + $0x60] sm:$0xff]
        %v421 = vld [vmem:[#allocation8 + $0x68] sm:$0xff]
        %v422 = vld [vmem:[#allocation8 + $0x70] sm:$0xff]
        %v423 = vld [vmem:[#allocation8 + $0x78] sm:$0xff]
        %424 = vmatpush.msra.mxu0 %v423
        %425 = vmatpush.msra.mxu0 %v422
        %426 = vmatpush.msra.mxu0 %v421
        %427 = vmatpush.msra.mxu0 %v420
        %428 = vmatpush.msra.mxu0 %v419
        %429 = vmatpush.msra.mxu0 %v418
        %430 = vmatpush.msra.mxu0 %v417
        %431 = vmatpush.msra.mxu0 %v416
        %432 = vmatpush.msra.mxu0 %v415
        %433 = vmatpush.msra.mxu0 %v414
        %434 = vmatpush.msra.mxu0 %v413
        %435 = vmatpush.msra.mxu0 %v412
        %436 = vmatpush.msra.mxu0 %v411
        %437 = vmatpush.msra.mxu0 %v410
        %438 = vmatpush.msra.mxu0 %v409
        %439 = vmatpush.msra.mxu0 %v408
        %440 = vmatmul.f32.gmra.mxu0 %v406
        %v441 = vpop.f32.mrf.mxu0
        %v442 = vadd.f32 0.0, %v441
        %443 = vdwg.mxu0
        %v444 = vadd.f32 %v407, %v442
        %445 = vst [vmem:[#allocation2] sm:$0xff] %v444
        // Predicated region
        $region57: #{tpu_custom_call.1} parent=39 // pred_check
          %p446 = pneg %p317
        $region58: #{tpu_custom_call.1} parent=39 // pred_check_branch
          %448 = sbr.rel (%p446) target = $region60
        $region59: #{tpu_custom_call.1} parent=39 // pred_region
          %v449 = vld [vmem:[#allocation2] sm:$0xff]
          %v450 = vld [vmem:[%s4] sm:$0x1]
          %v452 = vperm.slane %v450, 0
          %v454 = vadd.f32 %v449, %v452
          %455 = vst [vmem:[%s312] sm:$0xff] %v454
        $region60: #{tpu_custom_call.1} parent=39 // pred_fallthru
          _
        %s456 = sand.u32 %s168, 1
        %s457 = scalar_lea.sflag [#allocation5], %s456
        %s458 = sand.u32 %s168, 1
        %s459 = smul.addr %s458, 8
        %s460 = scalar_lea.vmem [#allocation9], %s459
        // Predicated region
        $region61: #{tpu_custom_call.1} parent=39 // pred_check
          %p461 = pneg %p178
        $region62: #{tpu_custom_call.1} parent=39 // pred_check_branch
          %463 = sbr.rel (%p461) target = $region64
        $region63: #{tpu_custom_call.1} parent=39 // pred_region
          %465 = vsyncadd %s457, 0
          %s466 = smul.addr %s27, 8
          %s467 = scalar_lea.hbm %s5, %s466
          %s469 = sshll.u32 %s460, 4
          %s470 = int_to_ptr.vmem [resolvable:$true] %s469
          %s471 = sshll.u32 %s467, 4
          %s472 = int_to_ptr.hbm [resolvable:$true] %s471
          %474 = dma.vmem_to_hbm [thread:$0]  %s470, 128, %s472, %s457
        $region64: #{tpu_custom_call.1} parent=39 // pred_fallthru
          _
      $region40: #{tpu_custom_call.1} parent=5 // pred_fallthru
        _
      %p475 = scmp.le.s32.totalorder 2, %s18
      // Predicated region
      $region65: #{tpu_custom_call.1} parent=5 // pred_check
        %p476 = pneg %p475
      $region66: #{tpu_custom_call.1} parent=5 // pred_check_branch
        %478 = sbr.rel (%p476) target = $region68
      $region67: #{tpu_custom_call.1} parent=5 // pred_region
        %s479 = ssub.s32 %s18, 2
        // Predicated region
        $region69: #{tpu_custom_call.1} parent=67 // pred_check
          %p480 = pneg %p184
        $region70: #{tpu_custom_call.1} parent=67 // pred_check_branch
          %482 = sbr.rel (%p480) target = $region72
        $region71: #{tpu_custom_call.1} parent=67 // pred_region
          %s483 = sand.u32 %s169, 1
          %s484 = scalar_lea.sflag [#allocation5], %s483
          %s485 = sand.u32 %s169, 1
          %s486 = smul.addr %s485, 8
          %s487 = scalar_lea.vmem [#allocation9], %s486
          %489 = dma.done %s484, 128
        $region72: #{tpu_custom_call.1} parent=67 // pred_fallthru
          _
      $region68: #{tpu_custom_call.1} parent=5 // pred_fallthru
        _
    $region6: #{tpu_custom_call.1} parent=1 // loop_footer
      %s22 = sadd.s32 1, %s18
    $region7: #{tpu_custom_call.1} parent=1 // loop_footer_branch
      %17 = sbr.rel target = $region3
    $region8: #{tpu_custom_call.1} parent=1 // loop_exit
      _
    %490 = vsyncpa [#allocation4], 1
    %s491 = scalar_lea.sflag [#allocation4], 1
    %492 = vsyncpa %s491, 1
    %493 = vsyncpa [#allocation7], 1
    %494 = vsyncpa [#allocation5], 1
    %s495 = scalar_lea.sflag [#allocation5], 1
    %496 = vsyncpa %s495, 1

</llo_original>
